<compile_context>
chip_gen: v5e
topology: v5e:2x2
jax: 0.10.0
libtpu: 0.0.40
codegen_flags: <defaults>
</compile_context>

<pallas_src>
from functools import partial

import jax
import jax.numpy as jnp
import numpy as np
from jax.experimental import pallas as pl
from jax.experimental.pallas import tpu as pltpu

TILE_M_MAX = 512      # tokens per grid step (sweep 512-1024 for large n_in)
SUBLANE = 16          # class-dim padding granularity (bf16 sublane packing)
NEG_BIG = -1e30       # f32 bias for padded (fake) classes


def _round_up(v, m):
    return ((v + m - 1) // m) * m


def _classify_kernel(x_ref, w_ref, b_ref, tag_ref, pred_ref, nll_ref):
    # x_ref:    (TILE_M, n_in)  f32    token features (cast to bf16 in-kernel)
    # w_ref:    (c_pad, n_in)   bf16   Linear weight, class-padded (resident)
    # b_ref:    (c_pad, 1)      f32    Linear bias (padded classes = -1e30)
    # tag_ref:  (1, TILE_M)     i32    gold tag per token (-1 = unlabeled / pad)
    # pred_ref: (1, TILE_M)     i32    argmax per token (lane-dense row)
    # nll_ref:  (1, TILE_M)     f32    per-token NLL (0 where unlabeled; summed outside)
    x = x_ref[...].astype(jnp.bfloat16)          # in-kernel cast, saves an HBM pass
    w = w_ref[...]

    # scores^T = W @ x^T -> (c_pad, TILE_M), f32 accumulation on the MXU.
    st = jax.lax.dot_general(
        w, x, (((1,), (1,)), ((), ())), preferred_element_type=jnp.float32)
    st = st + b_ref[...]                         # f32 bias, broadcast over lanes

    # log-sum-exp over the class (sublane) axis; logp never materialized.
    m = jnp.max(st, axis=0, keepdims=True)                       # (1, TILE_M)
    lse = jnp.log(jnp.sum(jnp.exp(st - m), axis=0, keepdims=True))

    c_pad = st.shape[0]
    cls_iota = jax.lax.broadcasted_iota(jnp.int32, st.shape, 0)

    # argmax over classes, first-occurrence tie-break (matches torch.max), f32 compares.
    is_max = st >= m
    pred = jnp.min(jnp.where(is_max, cls_iota.astype(jnp.float32),
                             jnp.float32(c_pad)),
                   axis=0, keepdims=True)                        # (1, TILE_M)
    pred_ref[...] = pred.astype(jnp.int32)

    # per-token NLL: -logp[gold] = m + lse - st[gold]; tag=-1 rows forced to 0
    # via select (NaN-safe for garbage rows of a ragged last x tile).
    tag_row = tag_ref[...]                                       # (1, TILE_M)
    hit = cls_iota == tag_row                                    # (c_pad, TILE_M)
    gold_st = jnp.sum(jnp.where(hit, st, 0.0), axis=0, keepdims=True)
    nll_ref[...] = jnp.where(tag_row >= 0, m + lse - gold_st, 0.0)


@partial(jax.jit, static_argnames=("tile_m",))
def _classify_device(x_f32, w_bf, b_col, tag, *, tile_m):
    n_rows, n_in = x_f32.shape          # x may be "ragged" w.r.t. tile_m
    c_pad = w_bf.shape[0]
    n_rows_pad = tag.shape[1]           # always a multiple of tile_m
    num_tiles = n_rows_pad // tile_m

    pred_row, nll_row = pl.pallas_call(
        _classify_kernel,
        out_shape=(
            jax.ShapeDtypeStruct((1, n_rows_pad), jnp.int32),    # argmax / token
            jax.ShapeDtypeStruct((1, n_rows_pad), jnp.float32),  # NLL / token
        ),
        grid_spec=pltpu.PrefetchScalarGridSpec(
            num_scalar_prefetch=0,
            grid=(num_tiles,),
            in_specs=[
                # x: last tile may run past n_rows; padded rows are masked by tag=-1.
                pl.BlockSpec((tile_m, n_in), lambda i: (i, 0)),
                # Resident weight / bias: constant index_map -> single buffer.
                pl.BlockSpec((c_pad, n_in), lambda i: (0, 0),
                             pipeline_mode=pl.Buffered(1)),
                pl.BlockSpec((c_pad, 1), lambda i: (0, 0),
                             pipeline_mode=pl.Buffered(1)),
                pl.BlockSpec((1, tile_m), lambda i: (0, i)),     # gold tags
            ],
            out_specs=[
                pl.BlockSpec((1, tile_m), lambda i: (0, i)),
                pl.BlockSpec((1, tile_m), lambda i: (0, i)),
            ],
        ),
        compiler_params=pltpu.CompilerParams(
            # No cross-tile state -> megacore OK.
            # TODO(synk): on v7x switch to pltpu.CORE_PARALLEL if the trace shows
            # only one TensorCore busy.
            dimension_semantics=("parallel",),
            # Under v7x's 64 MiB physical VMEM; plenty of headroom on v5e/v6e (128 MiB).
            vmem_limit_bytes=48 * 1024 * 1024),
    )(x_f32, w_bf, b_col, tag)
    return pred_row, jnp.sum(nll_row)


def classify_partial_forward(x, y, weight, bias, training=True):
    """x: (B, T, n_in) f32; y: list of per-sequence tag lists (y[0] is longest);
    weight: (tag_size, n_in) like nn.Linear; bias: (tag_size,).
    Returns (per-sequence argmax lists, summed NLL loss) as in training mode."""
    B, T, n_in = x.shape
    tag_size = weight.shape[0]
    max_len = len(y[0]) if len(y) > 0 else 0

    # The original module indexes x.view(-1, n_in) at i*max_len + t, which only
    # lines up with the (B, T, n_in) layout when T == max_len.
    assert max_len == T, f"expected len(y[0]) == T (got {max_len} vs {T})"
    assert len(y) <= B

    n_rows = B * T
    # Big tiles amortize per-step overhead; clamp at tiny row counts so the
    # block never exceeds what a single tile needs.
    tile_m = min(TILE_M_MAX, _round_up(max(n_rows, 8), 8))
    num_tiles = int(pl.cdiv(n_rows, tile_m))
    n_rows_pad = num_tiles * tile_m
    c_pad = _round_up(max(tag_size, 1), SUBLANE)

    # Host-side glue mirroring _get_indices + flatten(y): scatter gold tags onto
    # the flattened token grid; unlabeled / padded tokens get tag = -1.
    # TODO(synk): in a real pipeline, batch this host-side list handling outside
    # the per-step hot path.
    tags_np = np.full((1, n_rows_pad), -1, dtype=np.int32)
    for i, yi in enumerate(y):
        base = i * max_len
        for t, v in enumerate(yi):
            tags_np[0, base + t] = int(v)
    tag = jnp.asarray(tags_np)

    # x stays f32 and un-padded: the bf16 cast happens inside the kernel and the
    # ragged tail is handled by Pallas block padding + the tag=-1 mask.
    x_flat = x.reshape(n_rows, n_in)

    # Pad the class dim only to sublane granularity; fake classes get zero
    # weights and a -1e30 f32 bias so softmax / argmax / one-hot never see them.
    w_bf = jnp.pad(weight.astype(jnp.bfloat16), ((0, c_pad - tag_size), (0, 0)))
    b_col = jnp.pad(bias.astype(jnp.float32), (0, c_pad - tag_size),
                    constant_values=NEG_BIG).reshape(c_pad, 1)

    pred_row, loss = _classify_device(x_flat, w_bf, b_col, tag, tile_m=tile_m)
    pred_row, loss = jax.block_until_ready((pred_row, loss))

    # _get_tag_list: split per-sequence prefix predictions (host-side glue).
    pred_host = np.asarray(jax.device_get(pred_row)).reshape(-1)
    tag_list = []
    for i, yi in enumerate(y):
        base = i * max_len
        tag_list.append([int(pred_host[base + t]) for t in range(len(yi))])

    if not training:
        return tag_list, 0.0     # eval mode of the original returns a 0.0 loss
    return tag_list, float(loss)


if __name__ == "__main__":
    key = jax.random.PRNGKey(0)
    B, T, n_in, tag_size = 2, 8, 32, 8

    k_x, k_w, k_b = jax.random.split(key, 3)
    x = jax.random.normal(k_x, (B, T, n_in), dtype=jnp.float32)
    # deterministic synthetic "Linear" params
    bound = 1.0 / (n_in ** 0.5)
    weight = jax.random.uniform(k_w, (tag_size, n_in), jnp.float32, -bound, bound)
    bias = jax.random.uniform(k_b, (tag_size,), jnp.float32, -bound, bound)

    # partial labels: y[0] fully labeled (max_len = T), y[1] only a prefix
    y = [[1, 3, 0, 2, 5, 7, 4, 6], [2, 2, 1, 0, 3]]

    tag_list, loss = classify_partial_forward(x, y, weight, bias)

    # Pure-JAX reference with matching numerics (bf16 inputs, f32 accumulation).
    max_len = len(y[0])
    idx, tags = [], []
    for i, yi in enumerate(y):
        idx += [i * max_len + t for t in range(len(yi))]
        tags += [int(v) for v in yi]
    idx_a = jnp.array(idx, dtype=jnp.int32)
    tags_a = jnp.array(tags, dtype=jnp.int32)
    xg = jnp.take(x.reshape(-1, n_in), idx_a, axis=0).astype(jnp.bfloat16)
    ref_scores = jnp.dot(xg, weight.astype(jnp.bfloat16).T,
                         preferred_element_type=jnp.float32) + bias
    ref_logp = jax.nn.log_softmax(ref_scores, axis=-1)
    ref_pred = np.asarray(jax.device_get(jnp.argmax(ref_scores, axis=-1)))
    ref_loss = float(-jnp.sum(ref_logp[jnp.arange(len(idx)), tags_a]))

    ref_tag_list, last = [], 0
    for yi in y:
        ref_tag_list.append([int(v) for v in ref_pred[last:last + len(yi)]])
        last += len(yi)

    assert tag_list == ref_tag_list, (tag_list, ref_tag_list)
    assert abs(loss - ref_loss) < 1e-2 * max(1.0, abs(ref_loss)), (loss, ref_loss)

    print("KERNEL_OK")
</pallas_src>

<mosaic_0001>
module attributes {stable_mosaic.version = 11 : i64} {
  func.func @_classify_kernel(%arg0: i32, %arg1: memref<16x32xf32, #tpu.memory_space<vmem>>, %arg2: memref<16x32xbf16, #tpu.memory_space<vmem>>, %arg3: memref<16x1xf32, #tpu.memory_space<vmem>>, %arg4: memref<1x16xi32, #tpu.memory_space<vmem>>, %arg5: memref<1x16xi32, #tpu.memory_space<vmem>>, %arg6: memref<1x16xf32, #tpu.memory_space<vmem>>) attributes {dimension_semantics = [#tpu.dimension_semantics<parallel>], iteration_bounds = array<i64: 1>, scalar_prefetch = 0 : i64, scratch_operands = 0 : i64, tpu.core_type = #tpu.core_type<tc>, window_params = [{transform_indices = @transform_0, window_bounds = array<i64: 16, 32>}, {pipeline_mode = #tpu.pipeline_mode<synchronous>, transform_indices = @transform_1, window_bounds = array<i64: 16, 32>}, {pipeline_mode = #tpu.pipeline_mode<synchronous>, transform_indices = @transform_2, window_bounds = array<i64: 16, 1>}, {transform_indices = @transform_3, window_bounds = array<i64: 1, 16>}, {transform_indices = @transform_4, window_bounds = array<i64: 1, 16>}, {transform_indices = @transform_5, window_bounds = array<i64: 1, 16>}]} {
    %c0 = arith.constant 0 : index
    %c0_0 = arith.constant 0 : index
    %0 = vector.load %arg1[%c0, %c0_0] : memref<16x32xf32, #tpu.memory_space<vmem>>, vector<16x32xf32>
    %1 = arith.truncf %0 : vector<16x32xf32> to vector<16x32xbf16>
    %c0_1 = arith.constant 0 : index
    %c0_2 = arith.constant 0 : index
    %2 = vector.load %arg2[%c0_1, %c0_2] : memref<16x32xbf16, #tpu.memory_space<vmem>>, vector<16x32xbf16>
    %cst = arith.constant dense<0.000000e+00> : vector<16x16xf32>
    %3 = tpu.matmul %2, %1, %cst {dimension_numbers = #tpu.dot_dimension_numbers<[1], [1], [0], [0], [0, 0, 1, 0], [], []>} : vector<16x32xbf16>, vector<16x32xbf16>, vector<16x16xf32> -> vector<16x16xf32>
    %c0_3 = arith.constant 0 : index
    %c0_4 = arith.constant 0 : index
    %4 = vector.load %arg3[%c0_3, %c0_4] : memref<16x1xf32, #tpu.memory_space<vmem>>, vector<16x1xf32>
    %5 = vector.broadcast %4 : vector<16x1xf32> to vector<16x16xf32>
    %6 = arith.addf %3, %5 : vector<16x16xf32>
    %cst_5 = arith.constant dense<0xFF800000> : vector<16xf32>
    %7 = vector.multi_reduction <maximumf>, %6, %cst_5 [0] : vector<16x16xf32> to vector<16xf32>
    %8 = vector.shape_cast %7 : vector<16xf32> to vector<1x16xf32>
    %9 = vector.broadcast %8 : vector<1x16xf32> to vector<16x16xf32>
    %10 = arith.subf %6, %9 : vector<16x16xf32>
    %11 = math.exp %10 : vector<16x16xf32>
    %cst_6 = arith.constant dense<0.000000e+00> : vector<16xf32>
    %12 = vector.multi_reduction <add>, %11, %cst_6 [0] : vector<16x16xf32> to vector<16xf32>
    %13 = vector.shape_cast %12 : vector<16xf32> to vector<1x16xf32>
    %14 = math.log %13 : vector<1x16xf32>
    %15 = tpu.iota {dimensions = array<i32: 0>} : vector<16x16xi32>
    %16 = vector.broadcast %8 : vector<1x16xf32> to vector<16x16xf32>
    %17 = arith.cmpf oge, %6, %16 : vector<16x16xf32>
    %18 = arith.sitofp %15 : vector<16x16xi32> to vector<16x16xf32>
    %cst_7 = arith.constant 1.600000e+01 : f32
    %19 = vector.broadcast %cst_7 : f32 to vector<16x16xf32>
    %20 = arith.select %17, %18, %19 : vector<16x16xi1>, vector<16x16xf32>
    %cst_8 = arith.constant dense<0x7F800000> : vector<16xf32>
    %21 = vector.multi_reduction <minimumf>, %20, %cst_8 [0] : vector<16x16xf32> to vector<16xf32>
    %22 = vector.shape_cast %21 : vector<16xf32> to vector<1x16xf32>
    %23 = arith.fptosi %22 : vector<1x16xf32> to vector<1x16xi32>
    %c0_9 = arith.constant 0 : index
    %c0_10 = arith.constant 0 : index
    %24 = vector.load %arg5[%c0_9, %c0_10] : memref<1x16xi32, #tpu.memory_space<vmem>>, vector<1x16xi32>
    tpu.vector_store %arg5[%c0_9, %c0_10], %23 {strides = array<i32>} : memref<1x16xi32, #tpu.memory_space<vmem>>, vector<1x16xi32>,
    %c0_11 = arith.constant 0 : index
    %c0_12 = arith.constant 0 : index
    %25 = vector.load %arg4[%c0_11, %c0_12] : memref<1x16xi32, #tpu.memory_space<vmem>>, vector<1x16xi32>
    %26 = vector.broadcast %25 : vector<1x16xi32> to vector<16x16xi32>
    %27 = arith.cmpi eq, %15, %26 : vector<16x16xi32>
    %cst_13 = arith.constant 0.000000e+00 : f32
    %28 = vector.broadcast %cst_13 : f32 to vector<16x16xf32>
    %29 = arith.select %27, %6, %28 : vector<16x16xi1>, vector<16x16xf32>
    %cst_14 = arith.constant dense<0.000000e+00> : vector<16xf32>
    %30 = vector.multi_reduction <add>, %29, %cst_14 [0] : vector<16x16xf32> to vector<16xf32>
    %31 = vector.shape_cast %30 : vector<16xf32> to vector<1x16xf32>
    %c0_i32 = arith.constant 0 : i32
    %32 = vector.broadcast %c0_i32 : i32 to vector<1x16xi32>
    %33 = arith.cmpi sge, %25, %32 : vector<1x16xi32>
    %34 = arith.addf %8, %14 : vector<1x16xf32>
    %35 = arith.subf %34, %31 : vector<1x16xf32>
    %cst_15 = arith.constant 0.000000e+00 : f32
    %36 = vector.broadcast %cst_15 : f32 to vector<1x16xf32>
    %37 = arith.select %33, %35, %36 : vector<1x16xi1>, vector<1x16xf32>
    %c0_16 = arith.constant 0 : index
    %c0_17 = arith.constant 0 : index
    %38 = vector.load %arg6[%c0_16, %c0_17] : memref<1x16xf32, #tpu.memory_space<vmem>>, vector<1x16xf32>
    tpu.vector_store %arg6[%c0_16, %c0_17], %37 {strides = array<i32>} : memref<1x16xf32, #tpu.memory_space<vmem>>, vector<1x16xf32>,
    return
  }
  func.func @transform_0(%arg0: i32) -> (i32, i32) {
    %c0_i32 = arith.constant 0 : i32
    %c0_i32_0 = arith.constant 0 : i32
    return %arg0, %c0_i32 : i32, i32
  }
  func.func @transform_1(%arg0: i32) -> (i32, i32) {
    %c0_i32 = arith.constant 0 : i32
    %c0_i32_0 = arith.constant 0 : i32
    %c0_i32_1 = arith.constant 0 : i32
    return %c0_i32, %c0_i32_0 : i32, i32
  }
  func.func @transform_2(%arg0: i32) -> (i32, i32) {
    %c0_i32 = arith.constant 0 : i32
    %c0_i32_0 = arith.constant 0 : i32
    %c0_i32_1 = arith.constant 0 : i32
    return %c0_i32, %c0_i32_0 : i32, i32
  }
  func.func @transform_3(%arg0: i32) -> (i32, i32) {
    %c0_i32 = arith.constant 0 : i32
    %c0_i32_0 = arith.constant 0 : i32
    return %c0_i32, %arg0 : i32, i32
  }
  func.func @transform_4(%arg0: i32) -> (i32, i32) {
    %c0_i32 = arith.constant 0 : i32
    %c0_i32_0 = arith.constant 0 : i32
    return %c0_i32, %arg0 : i32, i32
  }
  func.func @transform_5(%arg0: i32) -> (i32, i32) {
    %c0_i32 = arith.constant 0 : i32
    %c0_i32_0 = arith.constant 0 : i32
    return %c0_i32, %arg0 : i32, i32
  }
}

</mosaic_0001>

<llo_original>
// kernel: _classify_device.1
$region0: #{_classify_device.1}
  #allocation0 [shape = 'u32[]', space=smem, size = 0x4, offset = 0x4, fixed_abs, tag = 'smem constant byte address 0x4 - core index']
  #allocation1 [shape = 'u32[72,128]{1,0:T(1,128)}', space=vmem, size = 0x9000, scoped, tag = 'internal scratch']
  %s0 = inlined_call_operand.vmem [shape: f32[16,32], index: 0, kind: input, shape index: {}]
  %s1 = inlined_call_operand.hbm [shape: bf16[16,32], index: 1, kind: input, shape index: {}]
  %s2 = inlined_call_operand.vmem [shape: f32[16,1], index: 2, kind: input, shape index: {}]
  %s3 = inlined_call_operand.vmem [shape: s32[1,16], index: 3, kind: input, shape index: {}]
  %s4 = inlined_call_operand.hbm [shape: s32[1,16], index: 4, kind: output, shape index: {0}]
  %s5 = inlined_call_operand.vmem [shape: f32[1,16], index: 5, kind: output, shape index: {1}]
  %6 = xla_tuple %s4, %s5
  %s7 = sld [smem:[#allocation0]]
  $region38: #{_classify_device.1} parent=0
    _
  %s9 = ssub.s32 1, %s7
  %s10 = scalar_select 0, %s9, %s7
  $region1: #{_classify_device.1} parent=0
    #allocation2 [shape = 'u8[4096]{0}', space=vmem, size = 0x1000, scoped, tag = 'input window, operand 1, single buffered']
    #allocation3 [shape = 's32[1]{0}', space=sflag, size = 0x4, scoped, tag = 'scoped memory for _classify_device.1']
    #allocation4 [shape = 's32[1]{0}', space=sflag, size = 0x4, scoped, tag = 'scoped memory for _classify_device.1']
    #allocation5 [shape = 'u8[512]{0}', space=vmem, size = 0x400, scoped, tag = 'output window, operand 0, single buffered']
    %11 = vsyncpa [#allocation3], 0
    %12 = vsyncpa [#allocation4], 0
    // Predicated region
    $region2: #{_classify_device.1} parent=1 // pred_check
      _
    $region3: #{_classify_device.1} parent=1 // pred_check_branch
      %14 = sbr.rel (0) target = $region5
    $region4: #{_classify_device.1} parent=1 // pred_region
      _
    $region5: #{_classify_device.1} parent=1 // pred_fallthru
      _
    // Predicated region
    $region6: #{_classify_device.1} parent=1 // pred_check
      _
    $region7: #{_classify_device.1} parent=1 // pred_check_branch
      %16 = sbr.rel (0) target = $region9
    $region8: #{_classify_device.1} parent=1 // pred_region
      %18 = vsyncadd [#allocation3], 0
      %s19 = sshll.u32 %s1, 4
      %s20 = int_to_ptr.hbm [resolvable:$true] %s19
      %s21 = sshll.u32 [#allocation2], 4
      %s22 = int_to_ptr.vmem [resolvable:$true] %s21
      %27 = dma.hbm_to_vmem [thread:$0]  %s20, 128, %s22, [#allocation3], 64, 64, 4
    $region9: #{_classify_device.1} parent=1 // pred_fallthru
      _
    // Predicated region
    $region10: #{_classify_device.1} parent=1 // pred_check
      _
    $region11: #{_classify_device.1} parent=1 // pred_check_branch
      %29 = sbr.rel (0) target = $region13
    $region12: #{_classify_device.1} parent=1 // pred_region
      _
    $region13: #{_classify_device.1} parent=1 // pred_fallthru
      _
    // Predicated region
    $region14: #{_classify_device.1} parent=1 // pred_check
      _
    $region15: #{_classify_device.1} parent=1 // pred_check_branch
      %31 = sbr.rel (0) target = $region17
    $region16: #{_classify_device.1} parent=1 // pred_region
      _
    $region17: #{_classify_device.1} parent=1 // pred_fallthru
      _
    // Predicated region
    $region18: #{_classify_device.1} parent=1 // pred_check
      _
    $region19: #{_classify_device.1} parent=1 // pred_check_branch
      %33 = sbr.rel (0) target = $region21
    $region20: #{_classify_device.1} parent=1 // pred_region
      %35 = dma.done [#allocation3], 128
    $region21: #{_classify_device.1} parent=1 // pred_fallthru
      _
    %v37 = vld [vmem:[%s0] sm:$0xff]
    %v38 = vld [vmem:[%s0 + $0x8] sm:$0xff]
    %v39 = vpack.c.bf16 %v38, %v37
    %v40 = vld [vmem:[#allocation2] sm:$0xf]
    %v41 = vld [vmem:[#allocation2 + $0x4] sm:$0xf]
    %v42 = vld [vmem:[%s2] sm:$0xff]
    %v43 = vld [vmem:[%s2 + $0x8] sm:$0xff]
    %45 = vset.pattern.permute.xlu0 0
    %46 = vperm.xlu0 %45, %v42
    %v47 = vpop.permute.xlu0 %46
    %50 = vset.pattern.permute.xlu0 0
    %51 = vperm.xlu0 %50, %v43
    %v52 = vpop.permute.xlu0 %51
    %v56 = vunpack.c.l.b16 %v40
    %v57 = vunpack.c.l.b16 %v41
    %v58 = vpack.c.b16 %v57, %v56
    %vm59 = vcmask 261120
    %v61 = vsel %vm59, %v58, 0
    %v64 = vsel %vm59, %v39, 0
    %66 = vmatpush.bf16.xpose.msra.mxu0 0
    %67 = vmatpush.bf16.xpose.msra.mxu0 0
    %68 = vmatpush.bf16.xpose.msra.mxu0 0
    %69 = vmatpush.bf16.xpose.msra.mxu0 0
    %70 = vmatpush.bf16.xpose.msra.mxu0 0
    %71 = vmatpush.bf16.xpose.msra.mxu0 0
    %72 = vmatpush.bf16.xpose.msra.mxu0 0
    %73 = vmatpush.bf16.xpose.msra.mxu0 %v64
    %74 = vmatmul.bf16.gmra.mxu0 %v61
    %v75 = vpop.f32.mrf.mxu0
    %v76 = vadd.f32 %v47, %v75
    %v77 = vpop.f32.mrf.mxu0
    %v78 = vadd.f32 %v52, %v77
    %79 = vdwg.mxu0
    %vm80 = vcmask 130048
    %v81 = vsel %vm80, %v76, -inf
    %v82 = vsel %vm80, %v78, -inf
    %v83 = vmax.f32 %v81, %v82
    %v84 = vrot.slane %v83, 4
    %v85 = vmax.f32 %v83, %v84
    %v86 = vrot.slane %v85, 2
    %v87 = vmax.f32 %v85, %v86
    %v88 = vrot.slane %v87, 1
    %v89 = vmax.f32 %v87, %v88
    %v90 = vsub.f32 %v76, %v89
    %v91 = vsub.f32 %v78, %v89
    %v92 = vmul.f32 %v90, 1.442695
    %v93 = vpow.pop %v92
    %v94 = vmul.f32 %v91, 1.442695
    %v95 = vpow.pop %v94
    %v96 = vsel %vm80, %v93, 0.0
    %v97 = vsel %vm80, %v95, 0.0
    %v98 = vadd.f32 %v96, %v97
    %v99 = vrot.slane %v98, 4
    %v100 = vadd.f32 %v98, %v99
    %v101 = vrot.slane %v100, 2
    %v102 = vadd.f32 %v100, %v101
    %v103 = vrot.slane %v102, 1
    %v104 = vadd.f32 %v102, %v103
    %v105 = vlog2.pop %v104
    %v106 = vmul.f32 %v105, 0.6931472
    %v107 = vlaneseq
    %v108 = vshrl.u32 %v107, 7
    %v109 = vadd.s32 %v108, 8
    %vm110 = vcmp.ge.f32.partialorder %v76, %v89
    %vm111 = vcmp.ge.f32.partialorder %v78, %v89
    %v112 = vcvt.s32.f32 %v108
    %v113 = vcvt.s32.f32 %v109
    %v114 = vsel %vm110, %v112, 16.0
    %v115 = vsel %vm111, %v113, 16.0
    %v116 = vsel %vm80, %v114, inf
    %v117 = vsel %vm80, %v115, inf
    %v118 = vmin.f32 %v116, %v117
    %v119 = vrot.slane %v118, 4
    %v120 = vmin.f32 %v118, %v119
    %v121 = vrot.slane %v120, 2
    %v122 = vmin.f32 %v120, %v121
    %v123 = vrot.slane %v122, 1
    %v124 = vmin.f32 %v122, %v123
    %v125 = vcvt.f32.s32.to.zero.pseudo %v124
    %vm126 = vcmask 122880
    %127 = vst.msk [vmem:[#allocation5] sm:$0x1] %vm126, %v125
    %v128 = vld [vmem:[%s3] sm:$0x1]
    %v129 = vperm.slane %v128, 0
    %vm130 = vcmp.eq.s32.totalorder %v108, %v129
    %vm131 = vcmp.eq.s32.totalorder %v109, %v129
    %v132 = vsel %vm130, %v76, 0.0
    %v133 = vsel %vm131, %v78, 0.0
    %v134 = vsel %vm80, %v132, 0.0
    %v135 = vsel %vm80, %v133, 0.0
    %v136 = vadd.f32 %v134, %v135
    %v137 = vrot.slane %v136, 4
    %v138 = vadd.f32 %v136, %v137
    %v139 = vrot.slane %v138, 2
    %v140 = vadd.f32 %v138, %v139
    %v141 = vrot.slane %v140, 1
    %v142 = vadd.f32 %v140, %v141
    %vm143 = vcmp.ge.s32.totalorder %v128, 0
    %v144 = vadd.f32 %v89, %v106
    %v145 = vsub.f32 %v144, %v142
    %v146 = vsel %vm143, %v145, 0.0
    %147 = vst.msk [vmem:[%s5] sm:$0x1] %vm126, %v146
    // Predicated region
    $region22: #{_classify_device.1} parent=1 // pred_check
      _
    $region23: #{_classify_device.1} parent=1 // pred_check_branch
      %149 = sbr.rel (0) target = $region25
    $region24: #{_classify_device.1} parent=1 // pred_region
      %151 = vsyncadd [#allocation4], 0
      %s153 = sshll.u32 [#allocation5], 4
      %s154 = int_to_ptr.vmem [resolvable:$true] %s153
      %s155 = sshll.u32 %s4, 4
      %s156 = int_to_ptr.hbm [resolvable:$true] %s155
      %158 = dma.vmem_to_hbm [thread:$0]  %s154, 16, %s156, [#allocation4]
    $region25: #{_classify_device.1} parent=1 // pred_fallthru
      _
    // Predicated region
    $region26: #{_classify_device.1} parent=1 // pred_check
      _
    $region27: #{_classify_device.1} parent=1 // pred_check_branch
      %160 = sbr.rel (0) target = $region29
    $region28: #{_classify_device.1} parent=1 // pred_region
      _
    $region29: #{_classify_device.1} parent=1 // pred_fallthru
      _
    // Predicated region
    $region30: #{_classify_device.1} parent=1 // pred_check
      _
    $region31: #{_classify_device.1} parent=1 // pred_check_branch
      %162 = sbr.rel (0) target = $region33
    $region32: #{_classify_device.1} parent=1 // pred_region
      %164 = dma.done [#allocation4], 16
    $region33: #{_classify_device.1} parent=1 // pred_fallthru
      _
    // Predicated region
    $region34: #{_classify_device.1} parent=1 // pred_check
      _
    $region35: #{_classify_device.1} parent=1 // pred_check_branch
      %166 = sbr.rel (0) target = $region37
    $region36: #{_classify_device.1} parent=1 // pred_region
      _
    $region37: #{_classify_device.1} parent=1 // pred_fallthru
      _
    %167 = vsyncpa [#allocation3], 1
    %168 = vsyncpa [#allocation4], 1

</llo_original>
